<compile_context>
chip_gen: v7x
topology: tpu7x:2x2x1
jax: 0.10.0
libtpu: 0.0.40
codegen_flags: <defaults>
</compile_context>

<pallas_src>
import functools

import jax
import jax.numpy as jnp
import numpy as np
from jax.experimental import pallas as pl
from jax.experimental.pallas import tpu as pltpu


def _round_up(v, m):
    return -(-v // m) * m


def _moving_avg_kernel_s1(x_ref, o_ref, *, kernel_size, pad, out_len):
    """stride == 1 path: replicate-pad + window sums on register values (no scratch)."""
    L, TN = x_ref.shape
    L_pad = L + 2 * pad

    x = x_ref[...].astype(jnp.float32)
    if pad > 0:
        front = jnp.broadcast_to(x[0:1, :], (pad, TN))
        end = jnp.broadcast_to(x[L - 1:L, :], (pad, TN))
        xp = jnp.concatenate([front, x, end], axis=0)
    else:
        xp = x

    inv_k = 1.0 / float(kernel_size)

    if kernel_size > 4:
        # O(log K) binary-doubling windowed sums (slice + add only).
        pow_sum = xp          # width-w window sums; w = 1, valid length L_pad - w + 1
        w = 1
        acc = None
        covered = 0
        rem = kernel_size
        while True:
            if rem & 1:
                piece = pow_sum[covered:covered + out_len, :]
                acc = piece if acc is None else acc + piece
                covered += w
            rem >>= 1
            if rem == 0:
                break
            valid = L_pad - 2 * w + 1
            pow_sum = pow_sum[0:valid, :] + pow_sum[w:w + valid, :]
            w *= 2
    else:
        # Tiny kernels: plain unrolled shifted slices.
        acc = xp[0:out_len, :]
        for k in range(1, kernel_size):
            acc = acc + xp[k:k + out_len, :]

    o_ref[...] = (acc * inv_k).astype(o_ref.dtype)


def _moving_avg_kernel_strided(x_ref, o_ref, xpad_ref, *, kernel_size, stride,
                               pad, out_len):
    """stride > 1 fallback: padded VMEM scratch (input dtype) + strided ref loads."""
    L, TN = x_ref.shape
    L_pad = L + 2 * pad

    x = x_ref[...]
    xpad_ref[pad:pad + L, :] = x
    if pad > 0:
        xpad_ref[0:pad, :] = jnp.broadcast_to(x[0:1, :], (pad, TN))
        xpad_ref[pad + L:L_pad, :] = jnp.broadcast_to(x[L - 1:L, :], (pad, TN))

    inv_k = 1.0 / float(kernel_size)
    acc = jnp.zeros((out_len, TN), jnp.float32)
    for k in range(kernel_size):
        acc = acc + xpad_ref[pl.ds(k, out_len, stride=stride), :].astype(jnp.float32)
    o_ref[...] = (acc * inv_k).astype(o_ref.dtype)


def moving_avg(x, kernel_size, stride):
    """Equivalent of the PyTorch moving_avg.forward for x of shape (B, L, C)."""
    B, L, C = x.shape
    pad = (kernel_size - 1) // 2
    L_pad = L + 2 * pad
    out_len = (L_pad - kernel_size) // stride + 1
    assert out_len >= 1, "kernel_size too large for this sequence length"

    N = B * C
    itemsize = jnp.dtype(x.dtype).itemsize

    # Lane-dense layout: time on the sublane axis, all B*C series on lanes.
    xt = jnp.transpose(x, (1, 0, 2)).reshape(L, N)

    # --- lane-tile (TN) selection ------------------------------------------
    # Conservative per-block footprint: double-buffered input + output plus the
    # f32 register-value temporaries of the padding/doubling path (and the
    # input-dtype scratch in the strided fallback), per lane column.
    BUDGET = 20 * 1024 * 1024
    per_lane = 2 * L * itemsize + 2 * out_len * itemsize + 6 * L_pad * 4
    n_round = _round_up(N, 128)
    if N <= 128:
        TN = N                                     # full extent; tiny problem
    else:
        max_tn = max(128, ((BUDGET // per_lane) // 128) * 128)
        if max_tn >= n_round:
            if N >= 256:
                # Everything fits in one block, but keep >=2 parallel blocks so
                # both v7x TensorCores get work.
                TN = min(n_round, max(128, _round_up(pl.cdiv(N, 2), 128)))
            else:
                TN = N                             # single full-extent block
        else:
            TN = max_tn                            # budget-limited, multiple of 128
    grid = (pl.cdiv(N, TN),)

    if stride == 1:
        kernel = functools.partial(_moving_avg_kernel_s1, kernel_size=kernel_size,
                                   pad=pad, out_len=out_len)
        scratch_shapes = []
    else:
        kernel = functools.partial(_moving_avg_kernel_strided,
                                   kernel_size=kernel_size, stride=stride,
                                   pad=pad, out_len=out_len)
        scratch_shapes = [pltpu.VMEM((L_pad, TN), x.dtype)]

    # Explicit scoped-VMEM limit derived from the real per-block footprint
    # (raises v5e's 16 MiB default, stays well under v7x's 64 MiB physical).
    footprint = TN * per_lane
    vmem_limit = int(min(max(int(footprint * 1.5) + (4 << 20), 32 << 20), 48 << 20))

    cost = pl.CostEstimate(
        flops=int(N * out_len * kernel_size),
        transcendentals=0,
        bytes_accessed=int(N * L * itemsize + N * out_len * itemsize),
    )

    out2d = pl.pallas_call(
        kernel,
        out_shape=jax.ShapeDtypeStruct((out_len, N), x.dtype),
        grid=grid,
        in_specs=[pl.BlockSpec((L, TN), lambda j: (0, j))],
        out_specs=pl.BlockSpec((out_len, TN), lambda j: (0, j)),
        scratch_shapes=scratch_shapes,
        compiler_params=pltpu.CompilerParams(
            dimension_semantics=("parallel",),
            vmem_limit_bytes=vmem_limit,
        ),
        cost_estimate=cost,
    )(xt)

    # Undo the lane-dense layout: (out_len, B*C) -> (B, out_len, C).
    return jnp.transpose(out2d.reshape(out_len, B, C), (1, 0, 2))


def _reference_numpy(x, kernel_size, stride):
    """Pure-numpy reference mirroring the PyTorch forward exactly."""
    x = np.asarray(x)
    pad = (kernel_size - 1) // 2
    front = np.repeat(x[:, 0:1, :], pad, axis=1)
    end = np.repeat(x[:, -1:, :], pad, axis=1)
    xp = np.concatenate([front, x, end], axis=1)
    B, L_pad, C = xp.shape
    out_len = (L_pad - kernel_size) // stride + 1
    out = np.zeros((B, out_len, C), dtype=np.float32)
    for t in range(out_len):
        out[:, t, :] = xp[:, t * stride:t * stride + kernel_size, :].mean(axis=1)
    return out.astype(x.dtype)


if __name__ == "__main__":
    key = jax.random.PRNGKey(0)
    k_small, k_wide = jax.random.split(key)

    # DSSRNN-style: (batch, seq_len, channels) with tiny C.
    x_small = jax.random.normal(k_small, (2, 96, 7), dtype=jnp.float32)
    # Wider case exercising lane tiling (N = B*C = 384 -> 2 lane blocks, ragged last).
    x_wide = jax.random.normal(k_wide, (4, 64, 96), dtype=jnp.float32)

    configs = [
        (25, 1),  # DSSRNN/Autoformer default decomposition window -> log-K path
        (5, 1),   # small odd kernel -> log-K path
        (3, 1),   # tiny kernel -> unrolled value path
        (4, 2),   # even kernel, strided pooling -> scratch + strided loads
    ]
    for xin in (x_small, x_wide):
        for kernel_size, stride in configs:
            out = jax.block_until_ready(moving_avg(xin, kernel_size, stride))
            ref = _reference_numpy(np.asarray(xin), kernel_size, stride)
            np.testing.assert_allclose(np.asarray(out), ref, rtol=1e-5, atol=1e-5)

    print("KERNEL_OK")
</pallas_src>

<mosaic_0001>
module attributes {stable_mosaic.version = 11 : i64} {
  func.func @_moving_avg_kernel_s1(%arg0: i32, %arg1: memref<96x14xf32, #tpu.memory_space<vmem>>, %arg2: memref<96x14xf32, #tpu.memory_space<vmem>>) attributes {dimension_semantics = [#tpu.dimension_semantics<parallel>], iteration_bounds = array<i64: 1>, scalar_prefetch = 0 : i64, scratch_operands = 0 : i64, tpu.core_type = #tpu.core_type<tc>, window_params = [{transform_indices = @transform_0, window_bounds = array<i64: 96, 14>}, {transform_indices = @transform_1, window_bounds = array<i64: 96, 14>}]} {
    %c0 = arith.constant 0 : index
    %c0_0 = arith.constant 0 : index
    %0 = vector.load %arg1[%c0, %c0_0] : memref<96x14xf32, #tpu.memory_space<vmem>>, vector<96x14xf32>
    %1 = vector.extract_strided_slice %0 {offsets = [0, 0], sizes = [1, 14], strides = [1, 1]} : vector<96x14xf32> to vector<1x14xf32>
    %2 = vector.shape_cast %1 : vector<1x14xf32> to vector<1x14xf32>
    %3 = vector.broadcast %2 : vector<1x14xf32> to vector<12x14xf32>
    %4 = vector.extract_strided_slice %0 {offsets = [95, 0], sizes = [1, 14], strides = [1, 1]} : vector<96x14xf32> to vector<1x14xf32>
    %5 = vector.shape_cast %4 : vector<1x14xf32> to vector<1x14xf32>
    %6 = vector.broadcast %5 : vector<1x14xf32> to vector<12x14xf32>
    %7 = tpu.concatenate %3, %0, %6 in 0 : vector<12x14xf32>, vector<96x14xf32>, vector<12x14xf32> -> vector<120x14xf32>
    %8 = vector.extract_strided_slice %7 {offsets = [0, 0], sizes = [96, 14], strides = [1, 1]} : vector<120x14xf32> to vector<96x14xf32>
    %9 = vector.extract_strided_slice %7 {offsets = [0, 0], sizes = [119, 14], strides = [1, 1]} : vector<120x14xf32> to vector<119x14xf32>
    %10 = vector.extract_strided_slice %7 {offsets = [1, 0], sizes = [119, 14], strides = [1, 1]} : vector<120x14xf32> to vector<119x14xf32>
    %11 = arith.addf %9, %10 : vector<119x14xf32>
    %12 = vector.extract_strided_slice %11 {offsets = [0, 0], sizes = [117, 14], strides = [1, 1]} : vector<119x14xf32> to vector<117x14xf32>
    %13 = vector.extract_strided_slice %11 {offsets = [2, 0], sizes = [117, 14], strides = [1, 1]} : vector<119x14xf32> to vector<117x14xf32>
    %14 = arith.addf %12, %13 : vector<117x14xf32>
    %15 = vector.extract_strided_slice %14 {offsets = [0, 0], sizes = [113, 14], strides = [1, 1]} : vector<117x14xf32> to vector<113x14xf32>
    %16 = vector.extract_strided_slice %14 {offsets = [4, 0], sizes = [113, 14], strides = [1, 1]} : vector<117x14xf32> to vector<113x14xf32>
    %17 = arith.addf %15, %16 : vector<113x14xf32>
    %18 = vector.extract_strided_slice %17 {offsets = [1, 0], sizes = [96, 14], strides = [1, 1]} : vector<113x14xf32> to vector<96x14xf32>
    %19 = arith.addf %8, %18 : vector<96x14xf32>
    %20 = vector.extract_strided_slice %17 {offsets = [0, 0], sizes = [105, 14], strides = [1, 1]} : vector<113x14xf32> to vector<105x14xf32>
    %21 = vector.extract_strided_slice %17 {offsets = [8, 0], sizes = [105, 14], strides = [1, 1]} : vector<113x14xf32> to vector<105x14xf32>
    %22 = arith.addf %20, %21 : vector<105x14xf32>
    %23 = vector.extract_strided_slice %22 {offsets = [9, 0], sizes = [96, 14], strides = [1, 1]} : vector<105x14xf32> to vector<96x14xf32>
    %24 = arith.addf %19, %23 : vector<96x14xf32>
    %cst = arith.constant 4.000000e-02 : f32
    %25 = vector.broadcast %cst : f32 to vector<96x14xf32>
    %26 = arith.mulf %24, %25 : vector<96x14xf32>
    %c0_1 = arith.constant 0 : index
    %c0_2 = arith.constant 0 : index
    %27 = vector.load %arg2[%c0_1, %c0_2] : memref<96x14xf32, #tpu.memory_space<vmem>>, vector<96x14xf32>
    tpu.vector_store %arg2[%c0_1, %c0_2], %26 {strides = array<i32>} : memref<96x14xf32, #tpu.memory_space<vmem>>, vector<96x14xf32>,
    return
  }
  func.func @transform_0(%arg0: i32) -> (i32, i32) {
    %c0_i32 = arith.constant 0 : i32
    %c0_i32_0 = arith.constant 0 : i32
    return %c0_i32, %arg0 : i32, i32
  }
  func.func @transform_1(%arg0: i32) -> (i32, i32) {
    %c0_i32 = arith.constant 0 : i32
    %c0_i32_0 = arith.constant 0 : i32
    return %c0_i32, %arg0 : i32, i32
  }
}

</mosaic_0001>

<llo_original>
// kernel: tpu_custom_call.1
$region0: #{tpu_custom_call.1}
  #allocation0 [shape = 'u32[]', space=smem, size = 0x4, offset = 0x4, fixed_abs, tag = 'smem constant byte address 0x4 - core index']
  #allocation1 [shape = 'u32[144,128]{1,0:T(1,128)}', space=vmem, size = 0x12000, scoped, tag = 'internal scratch']
  %s0 = inlined_call_operand.vmem [shape: f32[96,14], index: 0, kind: input, shape index: {}]
  %s1 = inlined_call_operand.vmem [shape: f32[96,14], index: 1, kind: output, shape index: {}]
  %s2 = sld [smem:[#allocation0]]
  $region14: #{tpu_custom_call.1} parent=0
    _
  %s4 = ssub.s32 1, %s2
  %s5 = scalar_select 0, %s4, %s2
  // Predicated region
  $region2: #{tpu_custom_call.1} parent=0 // pred_check
    _
  $region3: #{tpu_custom_call.1} parent=0 // pred_check_branch
    %7 = sbr.rel (0) target = $region5
  $region4: #{tpu_custom_call.1} parent=0 // pred_region
    _
  $region5: #{tpu_custom_call.1} parent=0 // pred_fallthru
    _
  %v8 = vld [vmem:[%s0] sm:$0xff]
  %v9 = vld [vmem:[%s0 + $0x8] sm:$0xff]
  %v10 = vld [vmem:[%s0 + $0x10] sm:$0xff]
  %v11 = vld [vmem:[%s0 + $0x18] sm:$0xff]
  %v12 = vld [vmem:[%s0 + $0x20] sm:$0xff]
  %v13 = vld [vmem:[%s0 + $0x28] sm:$0xff]
  %v14 = vld [vmem:[%s0 + $0x30] sm:$0xff]
  %v15 = vld [vmem:[%s0 + $0x38] sm:$0xff]
  %v16 = vld [vmem:[%s0 + $0x40] sm:$0xff]
  %v17 = vld [vmem:[%s0 + $0x48] sm:$0xff]
  %v18 = vld [vmem:[%s0 + $0x50] sm:$0xff]
  %v19 = vld [vmem:[%s0 + $0x58] sm:$0xff]
  %v20 = vlaneseq
  %v21 = vshrl.u32 %v20, 7
  %v22 = vsub.s32 0, %v21
  %v23 = vrot.slane %v8, %v22
  %v24 = vlaneseq
  %v25 = vshrl.u32 %v24, 7
  %v26 = vsub.s32 7, %v25
  %v27 = vrot.slane %v19, %v26
  %vm41 = vcmask 1043456
  %v42 = vrot.slane %v8, 4
  %v43 = vrot.slane %v9, 4
  %v44 = vsel %vm41, %v42, %v43
  %v45 = vrot.slane %v10, 4
  %v46 = vsel %vm41, %v43, %v45
  %v47 = vrot.slane %v11, 4
  %v48 = vsel %vm41, %v45, %v47
  %v49 = vrot.slane %v12, 4
  %v50 = vsel %vm41, %v47, %v49
  %v51 = vrot.slane %v13, 4
  %v52 = vsel %vm41, %v49, %v51
  %v53 = vrot.slane %v14, 4
  %v54 = vsel %vm41, %v51, %v53
  %v55 = vrot.slane %v15, 4
  %v56 = vsel %vm41, %v53, %v55
  %v57 = vrot.slane %v16, 4
  %v58 = vsel %vm41, %v55, %v57
  %v59 = vrot.slane %v17, 4
  %v60 = vsel %vm41, %v57, %v59
  %v61 = vrot.slane %v18, 4
  %v62 = vsel %vm41, %v59, %v61
  %v63 = vrot.slane %v19, 4
  %v64 = vsel %vm41, %v61, %v63
  %v79 = vsel %vm41, %v23, %v42
  %v80 = vsel %vm41, %v63, %v27
  %vm83 = vcmask 1046528
  %v84 = vrot.slane %v23, 1
  %v85 = vrot.slane %v79, 1
  %v86 = vsel %vm83, %v84, %v85
  %v87 = vrot.slane %v44, 1
  %v88 = vsel %vm83, %v85, %v87
  %v89 = vrot.slane %v46, 1
  %v90 = vsel %vm83, %v87, %v89
  %v91 = vrot.slane %v48, 1
  %v92 = vsel %vm83, %v89, %v91
  %v93 = vrot.slane %v50, 1
  %v94 = vsel %vm83, %v91, %v93
  %v95 = vrot.slane %v52, 1
  %v96 = vsel %vm83, %v93, %v95
  %v97 = vrot.slane %v54, 1
  %v98 = vsel %vm83, %v95, %v97
  %v99 = vrot.slane %v56, 1
  %v100 = vsel %vm83, %v97, %v99
  %v101 = vrot.slane %v58, 1
  %v102 = vsel %vm83, %v99, %v101
  %v103 = vrot.slane %v60, 1
  %v104 = vsel %vm83, %v101, %v103
  %v105 = vrot.slane %v62, 1
  %v106 = vsel %vm83, %v103, %v105
  %v107 = vrot.slane %v64, 1
  %v108 = vsel %vm83, %v105, %v107
  %v109 = vrot.slane %v80, 1
  %v110 = vsel %vm83, %v107, %v109
  %v111 = vrot.slane %v27, 1
  %v112 = vsel %vm83, %v109, %v111
  %v128 = vadd.f32 %v23, %v86
  %v129 = vadd.f32 %v79, %v88
  %v130 = vadd.f32 %v44, %v90
  %v131 = vadd.f32 %v46, %v92
  %v132 = vadd.f32 %v48, %v94
  %v133 = vadd.f32 %v50, %v96
  %v134 = vadd.f32 %v52, %v98
  %v135 = vadd.f32 %v54, %v100
  %v136 = vadd.f32 %v56, %v102
  %v137 = vadd.f32 %v58, %v104
  %v138 = vadd.f32 %v60, %v106
  %v139 = vadd.f32 %v62, %v108
  %v140 = vadd.f32 %v64, %v110
  %v141 = vadd.f32 %v80, %v112
  %v142 = vadd.f32 %v27, %v111
  %vm158 = vcmask 1045504
  %v159 = vrot.slane %v128, 2
  %v160 = vrot.slane %v129, 2
  %v161 = vsel %vm158, %v159, %v160
  %v162 = vrot.slane %v130, 2
  %v163 = vsel %vm158, %v160, %v162
  %v164 = vrot.slane %v131, 2
  %v165 = vsel %vm158, %v162, %v164
  %v166 = vrot.slane %v132, 2
  %v167 = vsel %vm158, %v164, %v166
  %v168 = vrot.slane %v133, 2
  %v169 = vsel %vm158, %v166, %v168
  %v170 = vrot.slane %v134, 2
  %v171 = vsel %vm158, %v168, %v170
  %v172 = vrot.slane %v135, 2
  %v173 = vsel %vm158, %v170, %v172
  %v174 = vrot.slane %v136, 2
  %v175 = vsel %vm158, %v172, %v174
  %v176 = vrot.slane %v137, 2
  %v177 = vsel %vm158, %v174, %v176
  %v178 = vrot.slane %v138, 2
  %v179 = vsel %vm158, %v176, %v178
  %v180 = vrot.slane %v139, 2
  %v181 = vsel %vm158, %v178, %v180
  %v182 = vrot.slane %v140, 2
  %v183 = vsel %vm158, %v180, %v182
  %v184 = vrot.slane %v141, 2
  %v185 = vsel %vm158, %v182, %v184
  %v186 = vrot.slane %v142, 2
  %v187 = vsel %vm158, %v184, %v186
  %v203 = vadd.f32 %v128, %v161
  %v204 = vadd.f32 %v129, %v163
  %v205 = vadd.f32 %v130, %v165
  %v206 = vadd.f32 %v131, %v167
  %v207 = vadd.f32 %v132, %v169
  %v208 = vadd.f32 %v133, %v171
  %v209 = vadd.f32 %v134, %v173
  %v210 = vadd.f32 %v135, %v175
  %v211 = vadd.f32 %v136, %v177
  %v212 = vadd.f32 %v137, %v179
  %v213 = vadd.f32 %v138, %v181
  %v214 = vadd.f32 %v139, %v183
  %v215 = vadd.f32 %v140, %v185
  %v216 = vadd.f32 %v141, %v187
  %v217 = vadd.f32 %v142, %v186
  %v233 = vrot.slane %v203, 4
  %v234 = vrot.slane %v204, 4
  %v235 = vsel %vm41, %v233, %v234
  %v236 = vrot.slane %v205, 4
  %v237 = vsel %vm41, %v234, %v236
  %v238 = vrot.slane %v206, 4
  %v239 = vsel %vm41, %v236, %v238
  %v240 = vrot.slane %v207, 4
  %v241 = vsel %vm41, %v238, %v240
  %v242 = vrot.slane %v208, 4
  %v243 = vsel %vm41, %v240, %v242
  %v244 = vrot.slane %v209, 4
  %v245 = vsel %vm41, %v242, %v244
  %v246 = vrot.slane %v210, 4
  %v247 = vsel %vm41, %v244, %v246
  %v248 = vrot.slane %v211, 4
  %v249 = vsel %vm41, %v246, %v248
  %v250 = vrot.slane %v212, 4
  %v251 = vsel %vm41, %v248, %v250
  %v252 = vrot.slane %v213, 4
  %v253 = vsel %vm41, %v250, %v252
  %v254 = vrot.slane %v214, 4
  %v255 = vsel %vm41, %v252, %v254
  %v256 = vrot.slane %v215, 4
  %v257 = vsel %vm41, %v254, %v256
  %v258 = vrot.slane %v216, 4
  %v259 = vsel %vm41, %v256, %v258
  %v260 = vrot.slane %v217, 4
  %v261 = vsel %vm41, %v258, %v260
  %v277 = vadd.f32 %v203, %v235
  %v278 = vadd.f32 %v204, %v237
  %v279 = vadd.f32 %v205, %v239
  %v280 = vadd.f32 %v206, %v241
  %v281 = vadd.f32 %v207, %v243
  %v282 = vadd.f32 %v208, %v245
  %v283 = vadd.f32 %v209, %v247
  %v284 = vadd.f32 %v210, %v249
  %v285 = vadd.f32 %v211, %v251
  %v286 = vadd.f32 %v212, %v253
  %v287 = vadd.f32 %v213, %v255
  %v288 = vadd.f32 %v214, %v257
  %v289 = vadd.f32 %v215, %v259
  %v290 = vadd.f32 %v216, %v261
  %v291 = vadd.f32 %v217, %v260
  %v305 = vrot.slane %v277, 1
  %v306 = vrot.slane %v278, 1
  %v307 = vsel %vm83, %v305, %v306
  %v308 = vrot.slane %v279, 1
  %v309 = vsel %vm83, %v306, %v308
  %v310 = vrot.slane %v280, 1
  %v311 = vsel %vm83, %v308, %v310
  %v312 = vrot.slane %v281, 1
  %v313 = vsel %vm83, %v310, %v312
  %v314 = vrot.slane %v282, 1
  %v315 = vsel %vm83, %v312, %v314
  %v316 = vrot.slane %v283, 1
  %v317 = vsel %vm83, %v314, %v316
  %v318 = vrot.slane %v284, 1
  %v319 = vsel %vm83, %v316, %v318
  %v320 = vrot.slane %v285, 1
  %v321 = vsel %vm83, %v318, %v320
  %v322 = vrot.slane %v286, 1
  %v323 = vsel %vm83, %v320, %v322
  %v324 = vrot.slane %v287, 1
  %v325 = vsel %vm83, %v322, %v324
  %v326 = vrot.slane %v288, 1
  %v327 = vsel %vm83, %v324, %v326
  %v328 = vrot.slane %v289, 1
  %v329 = vsel %vm83, %v326, %v328
  %v342 = vadd.f32 %v23, %v307
  %v343 = vadd.f32 %v79, %v309
  %v344 = vadd.f32 %v44, %v311
  %v345 = vadd.f32 %v46, %v313
  %v346 = vadd.f32 %v48, %v315
  %v347 = vadd.f32 %v50, %v317
  %v348 = vadd.f32 %v52, %v319
  %v349 = vadd.f32 %v54, %v321
  %v350 = vadd.f32 %v56, %v323
  %v351 = vadd.f32 %v58, %v325
  %v352 = vadd.f32 %v60, %v327
  %v353 = vadd.f32 %v62, %v329
  %v354 = vadd.f32 %v278, %v279
  %v355 = vadd.f32 %v279, %v280
  %v356 = vadd.f32 %v280, %v281
  %v357 = vadd.f32 %v281, %v282
  %v358 = vadd.f32 %v282, %v283
  %v359 = vadd.f32 %v283, %v284
  %v360 = vadd.f32 %v284, %v285
  %v361 = vadd.f32 %v285, %v286
  %v362 = vadd.f32 %v286, %v287
  %v363 = vadd.f32 %v287, %v288
  %v364 = vadd.f32 %v288, %v289
  %v365 = vadd.f32 %v289, %v290
  %v366 = vadd.f32 %v290, %v291
  %v380 = vrot.slane %v354, 1
  %v381 = vrot.slane %v355, 1
  %v382 = vsel %vm83, %v380, %v381
  %v383 = vrot.slane %v356, 1
  %v384 = vsel %vm83, %v381, %v383
  %v385 = vrot.slane %v357, 1
  %v386 = vsel %vm83, %v383, %v385
  %v387 = vrot.slane %v358, 1
  %v388 = vsel %vm83, %v385, %v387
  %v389 = vrot.slane %v359, 1
  %v390 = vsel %vm83, %v387, %v389
  %v391 = vrot.slane %v360, 1
  %v392 = vsel %vm83, %v389, %v391
  %v393 = vrot.slane %v361, 1
  %v394 = vsel %vm83, %v391, %v393
  %v395 = vrot.slane %v362, 1
  %v396 = vsel %vm83, %v393, %v395
  %v397 = vrot.slane %v363, 1
  %v398 = vsel %vm83, %v395, %v397
  %v399 = vrot.slane %v364, 1
  %v400 = vsel %vm83, %v397, %v399
  %v401 = vrot.slane %v365, 1
  %v402 = vsel %vm83, %v399, %v401
  %v403 = vrot.slane %v366, 1
  %v404 = vsel %vm83, %v401, %v403
  %v417 = vadd.f32 %v342, %v382
  %v418 = vadd.f32 %v343, %v384
  %v419 = vadd.f32 %v344, %v386
  %v420 = vadd.f32 %v345, %v388
  %v421 = vadd.f32 %v346, %v390
  %v422 = vadd.f32 %v347, %v392
  %v423 = vadd.f32 %v348, %v394
  %v424 = vadd.f32 %v349, %v396
  %v425 = vadd.f32 %v350, %v398
  %v426 = vadd.f32 %v351, %v400
  %v427 = vadd.f32 %v352, %v402
  %v428 = vadd.f32 %v353, %v404
  %v429 = vmul.f32 %v417, 0.04
  %v430 = vmul.f32 %v418, 0.04
  %v431 = vmul.f32 %v419, 0.04
  %v432 = vmul.f32 %v420, 0.04
  %v433 = vmul.f32 %v421, 0.04
  %v434 = vmul.f32 %v422, 0.04
  %v435 = vmul.f32 %v423, 0.04
  %v436 = vmul.f32 %v424, 0.04
  %v437 = vmul.f32 %v425, 0.04
  %v438 = vmul.f32 %v426, 0.04
  %v439 = vmul.f32 %v427, 0.04
  %v440 = vmul.f32 %v428, 0.04
  %vm441 = vcmask 113664
  %442 = vst.msk [vmem:[%s1] sm:$0xff] %vm441, %v429
  %443 = vst.msk [vmem:[%s1 + $0x8] sm:$0xff] %vm441, %v430
  %444 = vst.msk [vmem:[%s1 + $0x10] sm:$0xff] %vm441, %v431
  %445 = vst.msk [vmem:[%s1 + $0x18] sm:$0xff] %vm441, %v432
  %446 = vst.msk [vmem:[%s1 + $0x20] sm:$0xff] %vm441, %v433
  %447 = vst.msk [vmem:[%s1 + $0x28] sm:$0xff] %vm441, %v434
  %448 = vst.msk [vmem:[%s1 + $0x30] sm:$0xff] %vm441, %v435
  %449 = vst.msk [vmem:[%s1 + $0x38] sm:$0xff] %vm441, %v436
  %450 = vst.msk [vmem:[%s1 + $0x40] sm:$0xff] %vm441, %v437
  %451 = vst.msk [vmem:[%s1 + $0x48] sm:$0xff] %vm441, %v438
  %452 = vst.msk [vmem:[%s1 + $0x50] sm:$0xff] %vm441, %v439
  %453 = vst.msk [vmem:[%s1 + $0x58] sm:$0xff] %vm441, %v440
  // Predicated region
  $region6: #{tpu_custom_call.1} parent=0 // pred_check
    _
  $region7: #{tpu_custom_call.1} parent=0 // pred_check_branch
    %455 = sbr.rel (0) target = $region9
  $region8: #{tpu_custom_call.1} parent=0 // pred_region
    _
  $region9: #{tpu_custom_call.1} parent=0 // pred_fallthru
    _
  // Predicated region
  $region10: #{tpu_custom_call.1} parent=0 // pred_check
    _
  $region11: #{tpu_custom_call.1} parent=0 // pred_check_branch
    %457 = sbr.rel (0) target = $region13
  $region12: #{tpu_custom_call.1} parent=0 // pred_region
    _
  $region13: #{tpu_custom_call.1} parent=0 // pred_fallthru
    _

</llo_original>
